<compile_context>
chip_gen: v6e
topology: v6e:2x2x1
jax: 0.10.0
libtpu: 0.0.40
codegen_flags: <defaults>
</compile_context>

<pallas_src>
import jax
import jax.numpy as jnp
from jax.experimental import pallas as pl
from jax.experimental.pallas import tpu as pltpu

F_IN = 16        # input features (BatchNorm1d(16), Linear in_features)
F_OUT = 5        # Linear out_features
F_OUT_PAD = 8    # output rows padded to one full sublane group


def jsc_tiny_kernel(ss_ref, w_ref, b_ref, x_ref, o_ref):
    """ss_ref: (16, 2) [scale | shift], w_ref: (8, 16) zero-padded W,
    b_ref: (8, 1) zero-padded bias, x_ref: (16, TB), o_ref: (8, TB)."""
    scale = ss_ref[:, pl.ds(0, 1)]                      # (16, 1)
    shift = ss_ref[:, pl.ds(1, 1)]                      # (16, 1)
    # BatchNorm (folded, inference) + ReLU: full-tile VPU elementwise.
    h = jnp.maximum(x_ref[...] * scale + shift, 0.0)    # (16, TB)
    # Linear(16 -> 5, padded to 8 rows) on the MXU, bias + ReLU epilogue on VPU.
    y = jnp.dot(w_ref[...], h, preferred_element_type=jnp.float32)  # (8, TB)
    o_ref[...] = jnp.maximum(y + b_ref[...], 0.0)       # single unmasked store


def jsc_tiny_forward(x, bn_gamma, bn_beta, bn_mean, bn_var, lin_w, lin_b,
                     eps=1e-5, block_b=65536):
    """x: (B, 16) f32.  lin_w: (5, 16) as in PyTorch (out_features, in_features)."""
    B, F = x.shape
    assert F == F_IN and lin_w.shape == (F_OUT, F_IN)

    # Fold BN (inference / running-stats semantics) into per-feature scale & shift.
    inv_std = 1.0 / jnp.sqrt(bn_var.astype(jnp.float32) + eps)
    scale = bn_gamma.astype(jnp.float32) * inv_std
    shift = bn_beta.astype(jnp.float32) - bn_mean.astype(jnp.float32) * scale
    scale_shift = jnp.stack([scale, shift], axis=1)                # (16, 2)

    # Zero-pad W to (8, 16) and bias to (8, 1) -> full-vreg MXU dot + store.
    w_pad = jnp.zeros((F_OUT_PAD, F_IN), jnp.float32).at[:F_OUT].set(
        lin_w.astype(jnp.float32))                                 # (8, 16)
    b_pad = jnp.zeros((F_OUT_PAD, 1), jnp.float32).at[:F_OUT, 0].set(
        lin_b.astype(jnp.float32))                                 # (8, 1)

    # Batch-on-lanes layout: pad batch to a multiple of 128 lanes and transpose.
    b_pad_len = ((B + 127) // 128) * 128
    x_t = jnp.pad(x.astype(jnp.float32), ((0, b_pad_len - B), (0, 0))).T  # (16, b_pad)

    # Lane-tile size: big enough to amortize per-step overhead, small enough to
    # give >= 2 grid blocks (so v7x's second TensorCore gets work).
    tb = min(block_b, b_pad_len)
    if b_pad_len >= 2 * 128 and pl.cdiv(b_pad_len, tb) < 2:
        tb = ((b_pad_len // 2 + 127) // 128) * 128
    grid = (pl.cdiv(b_pad_len, tb),)

    out_t = pl.pallas_call(
        jsc_tiny_kernel,
        out_shape=jax.ShapeDtypeStruct((F_OUT_PAD, b_pad_len), jnp.float32),
        grid_spec=pltpu.PrefetchScalarGridSpec(
            num_scalar_prefetch=0,
            grid=grid,
            in_specs=[
                pl.BlockSpec((F_IN, 2), lambda i: (0, 0)),          # scale/shift
                pl.BlockSpec((F_OUT_PAD, F_IN), lambda i: (0, 0)),  # padded W
                pl.BlockSpec((F_OUT_PAD, 1), lambda i: (0, 0)),     # padded bias
                pl.BlockSpec((F_IN, tb), lambda i: (0, i)),         # x tile
            ],
            out_specs=pl.BlockSpec((F_OUT_PAD, tb), lambda i: (0, i)),
        ),
        compiler_params=pltpu.CompilerParams(
            dimension_semantics=("parallel",),   # shard batch over both TCs (v7x)
            vmem_limit_bytes=32 * 1024 * 1024,
        ),
    )(scale_shift, w_pad, b_pad, x_t)

    return out_t[:F_OUT, :B].T                                      # (B, 5)


def reference_forward(x, bn_gamma, bn_beta, bn_mean, bn_var, lin_w, lin_b, eps=1e-5):
    inv_std = 1.0 / jnp.sqrt(bn_var + eps)
    h = (x - bn_mean) * inv_std * bn_gamma + bn_beta
    h = jnp.maximum(h, 0.0)
    y = h @ lin_w.T + lin_b
    return jnp.maximum(y, 0.0)


if __name__ == "__main__":
    key = jax.random.PRNGKey(0)
    k_x, k_g, k_b, k_m, k_v, k_w, k_lb, k_x2 = jax.random.split(key, 8)

    B, F, OUT = 8, F_IN, F_OUT
    x = jax.random.normal(k_x, (B, F), dtype=jnp.float32)

    # Deterministic synthetic parameters (shapes from the module __init__).
    bn_gamma = 1.0 + 0.1 * jax.random.normal(k_g, (F,), dtype=jnp.float32)
    bn_beta = 0.1 * jax.random.normal(k_b, (F,), dtype=jnp.float32)
    bn_mean = 0.05 * jax.random.normal(k_m, (F,), dtype=jnp.float32)
    bn_var = jnp.abs(1.0 + 0.1 * jax.random.normal(k_v, (F,), dtype=jnp.float32))
    lin_w = jax.random.normal(k_w, (OUT, F), dtype=jnp.float32) * (1.0 / jnp.sqrt(F))
    lin_b = 0.1 * jax.random.normal(k_lb, (OUT,), dtype=jnp.float32)

    # Small demo batch (single 128-lane block).
    out = jax.block_until_ready(
        jsc_tiny_forward(x, bn_gamma, bn_beta, bn_mean, bn_var, lin_w, lin_b))
    ref = reference_forward(x, bn_gamma, bn_beta, bn_mean, bn_var, lin_w, lin_b)
    assert out.shape == (B, OUT)
    assert jnp.allclose(out, ref, atol=1e-5, rtol=1e-5)

    # Larger, non-multiple-of-128 batch exercising the multi-block tiled path
    # (b_pad=1024, tb=256 -> grid of 4 pipelined / core-parallel steps).
    B2 = 1000
    x2 = jax.random.normal(k_x2, (B2, F), dtype=jnp.float32)
    out2 = jax.block_until_ready(
        jsc_tiny_forward(x2, bn_gamma, bn_beta, bn_mean, bn_var, lin_w, lin_b,
                         block_b=256))
    ref2 = reference_forward(x2, bn_gamma, bn_beta, bn_mean, bn_var, lin_w, lin_b)
    assert out2.shape == (B2, OUT)
    assert jnp.allclose(out2, ref2, atol=1e-5, rtol=1e-5)

    # Default (large) tile path with the automatic grid>=2 split.
    out3 = jax.block_until_ready(
        jsc_tiny_forward(x2, bn_gamma, bn_beta, bn_mean, bn_var, lin_w, lin_b))
    assert jnp.allclose(out3, ref2, atol=1e-5, rtol=1e-5)

    print("KERNEL_OK")
</pallas_src>

<mosaic_0001>
module attributes {stable_mosaic.version = 11 : i64} {
  func.func @jsc_tiny_kernel(%arg0: i32, %arg1: memref<16x2xf32, #tpu.memory_space<vmem>>, %arg2: memref<8x16xf32, #tpu.memory_space<vmem>>, %arg3: memref<8x1xf32, #tpu.memory_space<vmem>>, %arg4: memref<16x128xf32, #tpu.memory_space<vmem>>, %arg5: memref<8x128xf32, #tpu.memory_space<vmem>>) attributes {dimension_semantics = [#tpu.dimension_semantics<parallel>], iteration_bounds = array<i64: 1>, scalar_prefetch = 0 : i64, scratch_operands = 0 : i64, tpu.core_type = #tpu.core_type<tc>, window_params = [{pipeline_mode = #tpu.pipeline_mode<synchronous>, transform_indices = @transform_0, window_bounds = array<i64: 16, 2>}, {pipeline_mode = #tpu.pipeline_mode<synchronous>, transform_indices = @transform_1, window_bounds = array<i64: 8, 16>}, {pipeline_mode = #tpu.pipeline_mode<synchronous>, transform_indices = @transform_2, window_bounds = array<i64: 8, 1>}, {transform_indices = @transform_3, window_bounds = array<i64: 16, 128>}, {transform_indices = @transform_4, window_bounds = array<i64: 8, 128>}]} {
    %c0 = arith.constant 0 : index
    %c0_0 = arith.constant 0 : index
    %0 = vector.load %arg1[%c0, %c0_0] : memref<16x2xf32, #tpu.memory_space<vmem>>, vector<16x1xf32>
    %c0_1 = arith.constant 0 : index
    %c1 = arith.constant 1 : index
    %1 = vector.load %arg1[%c0_1, %c1] : memref<16x2xf32, #tpu.memory_space<vmem>>, vector<16x1xf32>
    %c0_2 = arith.constant 0 : index
    %c0_3 = arith.constant 0 : index
    %2 = vector.load %arg4[%c0_2, %c0_3] : memref<16x128xf32, #tpu.memory_space<vmem>>, vector<16x128xf32>
    %3 = vector.broadcast %0 : vector<16x1xf32> to vector<16x128xf32>
    %4 = arith.mulf %2, %3 : vector<16x128xf32>
    %5 = vector.broadcast %1 : vector<16x1xf32> to vector<16x128xf32>
    %6 = arith.addf %4, %5 : vector<16x128xf32>
    %cst = arith.constant 0.000000e+00 : f32
    %7 = vector.broadcast %cst : f32 to vector<16x128xf32>
    %8 = arith.maximumf %6, %7 : vector<16x128xf32>
    %c0_4 = arith.constant 0 : index
    %c0_5 = arith.constant 0 : index
    %9 = vector.load %arg2[%c0_4, %c0_5] : memref<8x16xf32, #tpu.memory_space<vmem>>, vector<8x16xf32>
    %cst_6 = arith.constant dense<0.000000e+00> : vector<8x128xf32>
    %10 = tpu.matmul %9, %8, %cst_6 {dimension_numbers = #tpu.dot_dimension_numbers<[1], [0], [0], [1], [0, 0, 1, 1], [], []>} : vector<8x16xf32>, vector<16x128xf32>, vector<8x128xf32> -> vector<8x128xf32>
    %c0_7 = arith.constant 0 : index
    %c0_8 = arith.constant 0 : index
    %11 = vector.load %arg3[%c0_7, %c0_8] : memref<8x1xf32, #tpu.memory_space<vmem>>, vector<8x1xf32>
    %12 = vector.broadcast %11 : vector<8x1xf32> to vector<8x128xf32>
    %13 = arith.addf %10, %12 : vector<8x128xf32>
    %cst_9 = arith.constant 0.000000e+00 : f32
    %14 = vector.broadcast %cst_9 : f32 to vector<8x128xf32>
    %15 = arith.maximumf %13, %14 : vector<8x128xf32>
    %c0_10 = arith.constant 0 : index
    %c0_11 = arith.constant 0 : index
    %16 = vector.load %arg5[%c0_10, %c0_11] : memref<8x128xf32, #tpu.memory_space<vmem>>, vector<8x128xf32>
    tpu.vector_store %arg5[%c0_10, %c0_11], %15 {strides = array<i32>} : memref<8x128xf32, #tpu.memory_space<vmem>>, vector<8x128xf32>,
    return
  }
  func.func @transform_0(%arg0: i32) -> (i32, i32) {
    %c0_i32 = arith.constant 0 : i32
    %c0_i32_0 = arith.constant 0 : i32
    %c0_i32_1 = arith.constant 0 : i32
    return %c0_i32, %c0_i32_0 : i32, i32
  }
  func.func @transform_1(%arg0: i32) -> (i32, i32) {
    %c0_i32 = arith.constant 0 : i32
    %c0_i32_0 = arith.constant 0 : i32
    %c0_i32_1 = arith.constant 0 : i32
    return %c0_i32, %c0_i32_0 : i32, i32
  }
  func.func @transform_2(%arg0: i32) -> (i32, i32) {
    %c0_i32 = arith.constant 0 : i32
    %c0_i32_0 = arith.constant 0 : i32
    %c0_i32_1 = arith.constant 0 : i32
    return %c0_i32, %c0_i32_0 : i32, i32
  }
  func.func @transform_3(%arg0: i32) -> (i32, i32) {
    %c0_i32 = arith.constant 0 : i32
    %c0_i32_0 = arith.constant 0 : i32
    return %c0_i32, %arg0 : i32, i32
  }
  func.func @transform_4(%arg0: i32) -> (i32, i32) {
    %c0_i32 = arith.constant 0 : i32
    %c0_i32_0 = arith.constant 0 : i32
    return %c0_i32, %arg0 : i32, i32
  }
}

</mosaic_0001>

<llo_original>
// kernel: tpu_custom_call.1
$region0: #{tpu_custom_call.1}
  #allocation0 [shape = 'u32[]', space=smem, size = 0x4, offset = 0x4, fixed_abs, tag = 'smem constant byte address 0x4 - core index']
  #allocation1 [shape = 'u32[144,128]{1,0:T(1,128)}', space=vmem, size = 0x12000, scoped, tag = 'internal scratch']
  %s0 = inlined_call_operand.vmem [shape: f32[16,2], index: 0, kind: input, shape index: {}]
  %s1 = inlined_call_operand.vmem [shape: f32[8,16], index: 1, kind: input, shape index: {}]
  %s2 = inlined_call_operand.vmem [shape: f32[8,1], index: 2, kind: input, shape index: {}]
  %s3 = inlined_call_operand.vmem [shape: f32[16,128], index: 3, kind: input, shape index: {}]
  %s4 = inlined_call_operand.hbm [shape: f32[8,128], index: 4, kind: output, shape index: {}]
  %s5 = sld [smem:[#allocation0]]
  $region26: #{tpu_custom_call.1} parent=0
    _
  %s7 = ssub.s32 1, %s5
  %s8 = scalar_select 0, %s7, %s5
  $region1: #{tpu_custom_call.1} parent=0
    #allocation2 [shape = 'u8[4096]{0}', space=vmem, size = 0x1000, scoped, tag = 'output window, operand 0, single buffered']
    #allocation3 [shape = 's32[1]{0}', space=sflag, size = 0x4, scoped, tag = 'scoped memory for tpu_custom_call.1']
    %9 = vsyncpa [#allocation3], 0
    // Predicated region
    $region2: #{tpu_custom_call.1} parent=1 // pred_check
      _
    $region3: #{tpu_custom_call.1} parent=1 // pred_check_branch
      %11 = sbr.rel (0) target = $region5
    $region4: #{tpu_custom_call.1} parent=1 // pred_region
      _
    $region5: #{tpu_custom_call.1} parent=1 // pred_fallthru
      _
    // Predicated region
    $region6: #{tpu_custom_call.1} parent=1 // pred_check
      _
    $region7: #{tpu_custom_call.1} parent=1 // pred_check_branch
      %13 = sbr.rel (0) target = $region9
    $region8: #{tpu_custom_call.1} parent=1 // pred_region
      _
    $region9: #{tpu_custom_call.1} parent=1 // pred_fallthru
      _
    // Predicated region
    $region10: #{tpu_custom_call.1} parent=1 // pred_check
      _
    $region11: #{tpu_custom_call.1} parent=1 // pred_check_branch
      %15 = sbr.rel (0) target = $region13
    $region12: #{tpu_custom_call.1} parent=1 // pred_region
      _
    $region13: #{tpu_custom_call.1} parent=1 // pred_fallthru
      _
    // Predicated region
    $region14: #{tpu_custom_call.1} parent=1 // pred_check
      _
    $region15: #{tpu_custom_call.1} parent=1 // pred_check_branch
      %17 = sbr.rel (0) target = $region17
    $region16: #{tpu_custom_call.1} parent=1 // pred_region
      _
    $region17: #{tpu_custom_call.1} parent=1 // pred_fallthru
      _
    %v18 = vld [vmem:[%s0] sm:$0xff]
    %v19 = vld [vmem:[%s0 + $0x8] sm:$0xff]
    %v20 = vld [vmem:[%s3] sm:$0xff]
    %v21 = vld [vmem:[%s3 + $0x8] sm:$0xff]
    %23 = vset.pattern.permute.xlu0 0
    %24 = vperm.xlu0 %23, %v18
    %v25 = vpop.permute.xlu0 %24
    %28 = vset.pattern.permute.xlu0 0
    %29 = vperm.xlu0 %28, %v19
    %v30 = vpop.permute.xlu0 %29
    %v32 = vmul.f32 %v20, %v25
    %v33 = vmul.f32 %v21, %v30
    %34 = vset.pattern.permute.xlu0 1
    %35 = vperm.xlu0 %34, %v18
    %v36 = vpop.permute.xlu0 %35
    %38 = vset.pattern.permute.xlu0 1
    %39 = vperm.xlu0 %38, %v19
    %v40 = vpop.permute.xlu0 %39
    %v42 = vadd.f32 %v32, %v36
    %v43 = vadd.f32 %v33, %v40
    %v44 = vmax.f32 %v42, 0.0
    %v45 = vmax.f32 %v43, 0.0
    %v46 = vld [vmem:[%s1] sm:$0xff]
    %v47 = vld [vmem:[%s2] sm:$0xff]
    %49 = vset.pattern.permute.xlu0 0
    %50 = vperm.xlu0 %49, %v47
    %v51 = vpop.permute.xlu0 %50
    %vm53 = vcmask 130048
    %v55 = vsel %vm53, %v46, 0
    %57 = vmatprep.subr.mxu0 0.0
    %58 = vmatpush1.msra.mxu0 0.0
    %59 = vmatprep.subr.mxu0 0.0
    %60 = vmatpush1.msra.mxu0 0.0
    %61 = vmatprep.subr.mxu0 0.0
    %62 = vmatpush1.msra.mxu0 0.0
    %63 = vmatprep.subr.mxu0 0.0
    %64 = vmatpush1.msra.mxu0 0.0
    %65 = vmatprep.subr.mxu0 0.0
    %66 = vmatpush1.msra.mxu0 0.0
    %67 = vmatprep.subr.mxu0 0.0
    %68 = vmatpush1.msra.mxu0 0.0
    %69 = vmatprep.subr.mxu0 0.0
    %70 = vmatpush1.msra.mxu0 0.0
    %71 = vmatprep.subr.mxu0 0.0
    %72 = vmatpush1.msra.mxu0 0.0
    %73 = vmatprep.subr.mxu0 0.0
    %74 = vmatpush1.msra.mxu0 0.0
    %75 = vmatprep.subr.mxu0 0.0
    %76 = vmatpush1.msra.mxu0 0.0
    %77 = vmatprep.subr.mxu0 0.0
    %78 = vmatpush1.msra.mxu0 0.0
    %79 = vmatprep.subr.mxu0 0.0
    %80 = vmatpush1.msra.mxu0 0.0
    %81 = vmatprep.subr.mxu0 0.0
    %82 = vmatpush1.msra.mxu0 0.0
    %83 = vmatprep.subr.mxu0 0.0
    %84 = vmatpush1.msra.mxu0 0.0
    %85 = vmatprep.subr.mxu0 0.0
    %86 = vmatpush1.msra.mxu0 %v45
    %87 = vmatprep.subr.mxu0 0.0
    %88 = vmatpush1.msra.mxu0 %v44
    %89 = vmatprep.subr.mxu0 0.0
    %90 = vmatpush2.msra.mxu0 0.0
    %91 = vmatprep.subr.mxu0 0.0
    %92 = vmatpush2.msra.mxu0 0.0
    %93 = vmatprep.subr.mxu0 0.0
    %94 = vmatpush2.msra.mxu0 0.0
    %95 = vmatprep.subr.mxu0 0.0
    %96 = vmatpush2.msra.mxu0 0.0
    %97 = vmatprep.subr.mxu0 0.0
    %98 = vmatpush2.msra.mxu0 0.0
    %99 = vmatprep.subr.mxu0 0.0
    %100 = vmatpush2.msra.mxu0 0.0
    %101 = vmatprep.subr.mxu0 0.0
    %102 = vmatpush2.msra.mxu0 0.0
    %103 = vmatprep.subr.mxu0 0.0
    %104 = vmatpush2.msra.mxu0 0.0
    %105 = vmatprep.subr.mxu0 0.0
    %106 = vmatpush2.msra.mxu0 0.0
    %107 = vmatprep.subr.mxu0 0.0
    %108 = vmatpush2.msra.mxu0 0.0
    %109 = vmatprep.subr.mxu0 0.0
    %110 = vmatpush2.msra.mxu0 0.0
    %111 = vmatprep.subr.mxu0 0.0
    %112 = vmatpush2.msra.mxu0 0.0
    %113 = vmatprep.subr.mxu0 0.0
    %114 = vmatpush2.msra.mxu0 0.0
    %115 = vmatprep.subr.mxu0 0.0
    %116 = vmatpush2.msra.mxu0 0.0
    %117 = vmatprep.subr.mxu0 0.0
    %118 = vmatpush2.msra.mxu0 0.0
    %119 = vmatprep.subr.mxu0 0.0
    %120 = vmatpush2.msra.mxu0 0.0
    %121 = vmatprep.mubr.f32.mxu0 0.0
    %122 = vmatmul.mubr.f32.gmra.mxu0 %v55
    %v123 = vpop.f32.mrf.mxu0
    %v124 = vadd.f32 %v51, %v123
    %v125 = vpop.f32.mrf.mxu0
    %126 = vdwg.mxu0
    %v127 = vmax.f32 %v124, 0.0
    %128 = vst [vmem:[#allocation2] sm:$0xff] %v127
    // Predicated region
    $region18: #{tpu_custom_call.1} parent=1 // pred_check
      _
    $region19: #{tpu_custom_call.1} parent=1 // pred_check_branch
      %130 = sbr.rel (0) target = $region21
    $region20: #{tpu_custom_call.1} parent=1 // pred_region
      %s132 = ssub.s32 128, 128
      %133 = vsyncadd [#allocation3], %s132
      %s135 = sshll.u32 [#allocation2], 4
      %s136 = int_to_ptr.vmem [resolvable:$true] %s135
      %138 = dma.vmem_to_hbm [thread:$0]  %s136, 128, %s4, [#allocation3]
    $region21: #{tpu_custom_call.1} parent=1 // pred_fallthru
      _
    // Predicated region
    $region22: #{tpu_custom_call.1} parent=1 // pred_check
      _
    $region23: #{tpu_custom_call.1} parent=1 // pred_check_branch
      %140 = sbr.rel (0) target = $region25
    $region24: #{tpu_custom_call.1} parent=1 // pred_region
      %141 = dma.done [#allocation3], 128
    $region25: #{tpu_custom_call.1} parent=1 // pred_fallthru
      _
    %142 = vsyncpa [#allocation3], 1

</llo_original>
